<compile_context>
chip_gen: v7x
topology: tpu7x:2x2x1
jax: 0.10.0
libtpu: 0.0.40
codegen_flags: <defaults>
</compile_context>

<pallas_src>
import functools

import numpy as np
import jax
import jax.numpy as jnp
from jax import lax
from jax.experimental import pallas as pl
from jax.experimental.pallas import tpu as pltpu

EPS = 1e-5  # nn.InstanceNorm2d default


def _in_relu(t, gamma, beta, inv_n):
    """Single-pass InstanceNorm (biased var, affine) + ReLU.

    Reduces over all axes of `t` except axis 0 (the channel axis); gamma/beta
    are already broadcast-shaped like the per-channel stats.
    """
    s = t
    q = t * t
    for ax in range(t.ndim - 1, 0, -1):
        s = jnp.sum(s, axis=ax, keepdims=True)
        q = jnp.sum(q, axis=ax, keepdims=True)
    m = s * inv_n
    v = jnp.maximum(q * inv_n - m * m, 0.0)
    return jnp.maximum((t - m) * lax.rsqrt(v + EPS) * gamma + beta, 0.0)


# ---------------------------------------------------------------------------
# Fast path (stride == 1): flat (C, H*W) layout, lane-dense everywhere.
# ---------------------------------------------------------------------------
def _dsc_kernel_flat(x_ref, wdw_ref, wpt_ref, cmask_ref,
                     g1_ref, b1_ref, g2_ref, b2_ref, o_ref, *, W, use_mxu):
    x = x_ref[0].astype(jnp.float32)            # (Cin, HW)   HW on lanes
    wdw = wdw_ref[...].astype(jnp.float32)      # (9, Cin, 1)
    wpt = wpt_ref[...].astype(jnp.float32)      # (Cout, Cin)
    cmask = cmask_ref[...].astype(jnp.float32)  # (2, HW) column-border masks
    g1 = g1_ref[...].astype(jnp.float32)        # (Cin, 1)
    b1 = b1_ref[...].astype(jnp.float32)
    g2 = g2_ref[...].astype(jnp.float32)        # (Cout, 1)
    b2 = b2_ref[...].astype(jnp.float32)

    Cin, HW = x.shape
    Cout = wpt.shape[0]
    inv_n = 1.0 / float(HW)

    # ---- depthwise 3x3, padding=1, stride=1: 9 lane-shifted FMAs ------------
    # Sources with the column that would wrap across a row boundary zeroed:
    #   b = -1 reads col j-1 -> zero source col W-1 ; b = +1 -> zero col 0.
    src = {-1: x * cmask[0:1, :], 0: x, 1: x * cmask[1:2, :]}

    def shift(v, k):  # s[:, p] = v[:, p + k], zero outside [0, HW)
        if k == 0:
            return v
        pad = jnp.zeros((Cin, abs(k)), jnp.float32)
        if k > 0:
            return jnp.concatenate([v[:, k:], pad], axis=1)
        return jnp.concatenate([pad, v[:, :HW + k]], axis=1)

    acc = jnp.zeros((Cin, HW), jnp.float32)
    for a in (-1, 0, 1):
        for b in (-1, 0, 1):
            tap = wdw[(a + 1) * 3 + (b + 1)]            # (Cin, 1)
            acc = acc + shift(src[b], a * W + b) * tap

    # ---- InstanceNorm2d(Cin, affine=True) + ReLU -----------------------------
    y = _in_relu(acc, g1, b1, inv_n)

    # ---- pointwise 1x1 conv --------------------------------------------------
    if use_mxu:
        y2 = jnp.dot(wpt, y, preferred_element_type=jnp.float32)
    else:
        # Small channel counts: Cin broadcast-FMAs on the VPU, no relayout.
        y2 = jnp.zeros((Cout, HW), jnp.float32)
        for ci in range(Cin):
            y2 = y2 + wpt[:, ci:ci + 1] * y[ci:ci + 1, :]

    # ---- InstanceNorm2d(Cout, affine=True) + ReLU ----------------------------
    z = _in_relu(y2, g2, b2, inv_n)
    o_ref[0] = z.astype(o_ref.dtype)            # lane-dense store (HW >= 128)


# ---------------------------------------------------------------------------
# Fallback path (stride > 1): NCHW layout with in-VMEM halo (previous kernel).
# ---------------------------------------------------------------------------
def _dsc_kernel_2d(x_ref, wdw_ref, wpw_ref, g1_ref, b1_ref, g2_ref, b2_ref,
                   o_ref, *, stride, Ho, Wo):
    x = x_ref[0].astype(jnp.float32)           # (Cin, H, W)
    wdw = wdw_ref[...].astype(jnp.float32)     # (9, Cin, 1, 1)
    wpw = wpw_ref[...].astype(jnp.float32)     # (Cin, Cout, 1, 1)
    g1 = g1_ref[...].astype(jnp.float32)       # (Cin, 1, 1)
    b1 = b1_ref[...].astype(jnp.float32)
    g2 = g2_ref[...].astype(jnp.float32)       # (Cout, 1, 1)
    b2 = b2_ref[...].astype(jnp.float32)
    Cin, H, W = x.shape
    Cout = wpw.shape[1]

    zc = jnp.zeros((Cin, H, 1), jnp.float32)
    xp = jnp.concatenate([zc, x, zc], axis=2)            # (Cin, H, W+2)
    zr = jnp.zeros((Cin, 1, W + 2), jnp.float32)
    xp = jnp.concatenate([zr, xp, zr], axis=1)           # (Cin, H+2, W+2)

    strides = None if stride == 1 else (1, stride, stride)
    acc = jnp.zeros((Cin, Ho, Wo), jnp.float32)
    for a in range(3):
        for b in range(3):
            win = lax.slice(
                xp, (0, a, b),
                (Cin, a + stride * (Ho - 1) + 1, b + stride * (Wo - 1) + 1),
                strides)
            acc = acc + win * wdw[3 * a + b]

    inv_n = 1.0 / float(Ho * Wo)
    y = _in_relu(acc, g1, b1, inv_n)

    y2 = jnp.zeros((Cout, Ho, Wo), jnp.float32)
    for ci in range(Cin):
        y2 = y2 + y[ci:ci + 1] * wpw[ci]                  # (1,Ho,Wo)*(Cout,1,1)

    z = _in_relu(y2, g2, b2, inv_n)
    o_ref[0] = z.astype(o_ref.dtype)


def depthwise_separable_conv(x_nchw, w_dw, w_pw, g1, b1, g2, b2, *, stride):
    """x_nchw: (N,Cin,H,W); w_dw: (3,3,Cin); w_pw: (Cin,Cout); g*/b*: (C,)."""
    N, Cin, H, W = x_nchw.shape
    Cout = w_pw.shape[1]
    Ho = (H + 2 - 3) // stride + 1
    Wo = (W + 2 - 3) // stride + 1

    flops = int(N * Ho * Wo * (18 * Cin + 2 * Cin * Cout + 10 * (Cin + Cout)))
    bytes_accessed = int(4 * (x_nchw.size + N * Cout * Ho * Wo
                              + w_dw.size + w_pw.size + 2 * Cin + 2 * Cout))
    cost = pl.CostEstimate(flops=flops,
                           transcendentals=int(N * (Cin + Cout)),
                           bytes_accessed=bytes_accessed)
    cparams = pltpu.CompilerParams(dimension_semantics=("parallel",),
                                   vmem_limit_bytes=32 * 1024 * 1024)

    if stride == 1:
        # ---- flat (C, H*W) fast path ------------------------------------
        HW = H * W
        x_flat = x_nchw.reshape(N, Cin, HW)           # metadata-only reshape
        wdw_r = w_dw.reshape(9, Cin)[:, :, None]      # (9, Cin, 1)
        wpt = jnp.transpose(w_pw)                     # (Cout, Cin)
        col = np.arange(W)
        cmask = jnp.asarray(np.stack([
            np.tile((col != W - 1).astype(np.float32), H),   # b = -1 sources
            np.tile((col != 0).astype(np.float32), H),       # b = +1 sources
        ]))                                            # (2, HW)
        g1r, b1r = g1[:, None], b1[:, None]
        g2r, b2r = g2[:, None], b2[:, None]

        kernel = functools.partial(_dsc_kernel_flat, W=W,
                                   use_mxu=(Cin >= 16 and Cout >= 16))
        out_flat = pl.pallas_call(
            kernel,
            out_shape=jax.ShapeDtypeStruct((N, Cout, HW), x_nchw.dtype),
            grid_spec=pltpu.PrefetchScalarGridSpec(
                num_scalar_prefetch=0,
                grid=(N,),
                in_specs=[
                    pl.BlockSpec((1, Cin, HW), lambda n: (n, 0, 0)),
                    pl.BlockSpec((9, Cin, 1), lambda n: (0, 0, 0)),
                    pl.BlockSpec((Cout, Cin), lambda n: (0, 0)),
                    pl.BlockSpec((2, HW), lambda n: (0, 0)),
                    pl.BlockSpec((Cin, 1), lambda n: (0, 0)),
                    pl.BlockSpec((Cin, 1), lambda n: (0, 0)),
                    pl.BlockSpec((Cout, 1), lambda n: (0, 0)),
                    pl.BlockSpec((Cout, 1), lambda n: (0, 0)),
                ],
                out_specs=pl.BlockSpec((1, Cout, HW), lambda n: (n, 0, 0)),
            ),
            compiler_params=cparams,
            cost_estimate=cost,
        )(x_flat, wdw_r, wpt, cmask, g1r, b1r, g2r, b2r)
        return out_flat.reshape(N, Cout, Ho, Wo)      # metadata-only reshape

    # ---- stride > 1: NCHW fallback path ----------------------------------
    wdw_r = w_dw.reshape(9, Cin, 1, 1)
    wpw_r = w_pw.reshape(Cin, Cout, 1, 1)
    g1r, b1r = g1.reshape(Cin, 1, 1), b1.reshape(Cin, 1, 1)
    g2r, b2r = g2.reshape(Cout, 1, 1), b2.reshape(Cout, 1, 1)
    kernel = functools.partial(_dsc_kernel_2d, stride=stride, Ho=Ho, Wo=Wo)
    return pl.pallas_call(
        kernel,
        out_shape=jax.ShapeDtypeStruct((N, Cout, Ho, Wo), x_nchw.dtype),
        grid_spec=pltpu.PrefetchScalarGridSpec(
            num_scalar_prefetch=0,
            grid=(N,),
            in_specs=[
                pl.BlockSpec((1, Cin, H, W), lambda n: (n, 0, 0, 0)),
                pl.BlockSpec((9, Cin, 1, 1), lambda n: (0, 0, 0, 0)),
                pl.BlockSpec((Cin, Cout, 1, 1), lambda n: (0, 0, 0, 0)),
                pl.BlockSpec((Cin, 1, 1), lambda n: (0, 0, 0)),
                pl.BlockSpec((Cin, 1, 1), lambda n: (0, 0, 0)),
                pl.BlockSpec((Cout, 1, 1), lambda n: (0, 0, 0)),
                pl.BlockSpec((Cout, 1, 1), lambda n: (0, 0, 0)),
            ],
            out_specs=pl.BlockSpec((1, Cout, Ho, Wo), lambda n: (n, 0, 0, 0)),
        ),
        compiler_params=cparams,
        cost_estimate=cost,
    )(x_nchw, wdw_r, wpw_r, g1r, b1r, g2r, b2r)


def _reference(x, w_dw, w_pw, g1, b1, g2, b2, stride):
    """Pure-JAX reference matching the PyTorch module semantics (NCHW)."""
    N, Cin, H, W = x.shape

    def inorm(t, g, b):
        m = jnp.mean(t, axis=(2, 3), keepdims=True)
        v = jnp.mean((t - m) ** 2, axis=(2, 3), keepdims=True)
        return ((t - m) * lax.rsqrt(v + EPS) * g[None, :, None, None]
                + b[None, :, None, None])

    wdw_oihw = jnp.transpose(w_dw, (2, 0, 1))[:, None, :, :]   # (Cin,1,3,3)
    y = lax.conv_general_dilated(
        x, wdw_oihw, (stride, stride), ((1, 1), (1, 1)),
        feature_group_count=Cin,
        dimension_numbers=("NCHW", "OIHW", "NCHW"))
    y = jax.nn.relu(inorm(y, g1, b1))
    wpw_oihw = jnp.transpose(w_pw, (1, 0))[:, :, None, None]   # (Cout,Cin,1,1)
    z = lax.conv_general_dilated(
        y, wpw_oihw, (1, 1), ((0, 0), (0, 0)),
        dimension_numbers=("NCHW", "OIHW", "NCHW"))
    return jax.nn.relu(inorm(z, g2, b2))


if __name__ == "__main__":
    N, Cin, Cout, H, W = 2, 4, 8, 16, 16
    stride = 1

    key = jax.random.PRNGKey(0)
    kx, kd, kp, k1, k2, k3, k4 = jax.random.split(key, 7)
    x = jax.random.normal(kx, (N, Cin, H, W), jnp.float32)
    w_dw = jax.random.normal(kd, (3, 3, Cin), jnp.float32) * 0.3
    w_pw = jax.random.normal(kp, (Cin, Cout), jnp.float32) * 0.3
    gamma1 = 1.0 + 0.1 * jax.random.normal(k1, (Cin,), jnp.float32)
    beta1 = 0.1 * jax.random.normal(k2, (Cin,), jnp.float32)
    gamma2 = 1.0 + 0.1 * jax.random.normal(k3, (Cout,), jnp.float32)
    beta2 = 0.1 * jax.random.normal(k4, (Cout,), jnp.float32)

    out = depthwise_separable_conv(x, w_dw, w_pw, gamma1, beta1,
                                   gamma2, beta2, stride=stride)
    out = jax.block_until_ready(out)

    ref = _reference(x, w_dw, w_pw, gamma1, beta1, gamma2, beta2, stride)
    assert out.shape == (N, Cout, H // stride, W // stride)
    assert jnp.allclose(out, ref, atol=2e-4, rtol=2e-4), (
        float(jnp.max(jnp.abs(out - ref))))
    print("KERNEL_OK")
</pallas_src>

<mosaic_0001>
module attributes {stable_mosaic.version = 11 : i64} {
  func.func @_dsc_kernel_flat(%arg0: i32, %arg1: memref<1x4x256xf32, #tpu.memory_space<vmem>>, %arg2: memref<9x4x1xf32, #tpu.memory_space<vmem>>, %arg3: memref<8x4xf32, #tpu.memory_space<vmem>>, %arg4: memref<2x256xf32, #tpu.memory_space<vmem>>, %arg5: memref<4x1xf32, #tpu.memory_space<vmem>>, %arg6: memref<4x1xf32, #tpu.memory_space<vmem>>, %arg7: memref<8x1xf32, #tpu.memory_space<vmem>>, %arg8: memref<8x1xf32, #tpu.memory_space<vmem>>, %arg9: memref<1x8x256xf32, #tpu.memory_space<vmem>>) attributes {dimension_semantics = [#tpu.dimension_semantics<parallel>], iteration_bounds = array<i64: 2>, scalar_prefetch = 0 : i64, scratch_operands = 0 : i64, tpu.core_type = #tpu.core_type<tc>, window_params = [{transform_indices = @transform_0, window_bounds = array<i64: 1, 4, 256>}, {pipeline_mode = #tpu.pipeline_mode<synchronous>, transform_indices = @transform_1, window_bounds = array<i64: 9, 4, 1>}, {pipeline_mode = #tpu.pipeline_mode<synchronous>, transform_indices = @transform_2, window_bounds = array<i64: 8, 4>}, {pipeline_mode = #tpu.pipeline_mode<synchronous>, transform_indices = @transform_3, window_bounds = array<i64: 2, 256>}, {pipeline_mode = #tpu.pipeline_mode<synchronous>, transform_indices = @transform_4, window_bounds = array<i64: 4, 1>}, {pipeline_mode = #tpu.pipeline_mode<synchronous>, transform_indices = @transform_5, window_bounds = array<i64: 4, 1>}, {pipeline_mode = #tpu.pipeline_mode<synchronous>, transform_indices = @transform_6, window_bounds = array<i64: 8, 1>}, {pipeline_mode = #tpu.pipeline_mode<synchronous>, transform_indices = @transform_7, window_bounds = array<i64: 8, 1>}, {transform_indices = @transform_8, window_bounds = array<i64: 1, 8, 256>}]} {
    %c0 = arith.constant 0 : index
    %c0_0 = arith.constant 0 : index
    %c0_1 = arith.constant 0 : index
    %0 = vector.load %arg1[%c0, %c0_0, %c0_1] : memref<1x4x256xf32, #tpu.memory_space<vmem>>, vector<1x4x256xf32>
    %1 = vector.shape_cast %0 : vector<1x4x256xf32> to vector<4x256xf32>
    %c0_2 = arith.constant 0 : index
    %c0_3 = arith.constant 0 : index
    %c0_4 = arith.constant 0 : index
    %2 = vector.load %arg2[%c0_2, %c0_3, %c0_4] : memref<9x4x1xf32, #tpu.memory_space<vmem>>, vector<9x4x1xf32>
    %c0_5 = arith.constant 0 : index
    %c0_6 = arith.constant 0 : index
    %3 = vector.load %arg3[%c0_5, %c0_6] : memref<8x4xf32, #tpu.memory_space<vmem>>, vector<8x4xf32>
    %c0_7 = arith.constant 0 : index
    %c0_8 = arith.constant 0 : index
    %4 = vector.load %arg4[%c0_7, %c0_8] : memref<2x256xf32, #tpu.memory_space<vmem>>, vector<2x256xf32>
    %c0_9 = arith.constant 0 : index
    %c0_10 = arith.constant 0 : index
    %5 = vector.load %arg5[%c0_9, %c0_10] : memref<4x1xf32, #tpu.memory_space<vmem>>, vector<4x1xf32>
    %c0_11 = arith.constant 0 : index
    %c0_12 = arith.constant 0 : index
    %6 = vector.load %arg6[%c0_11, %c0_12] : memref<4x1xf32, #tpu.memory_space<vmem>>, vector<4x1xf32>
    %c0_13 = arith.constant 0 : index
    %c0_14 = arith.constant 0 : index
    %7 = vector.load %arg7[%c0_13, %c0_14] : memref<8x1xf32, #tpu.memory_space<vmem>>, vector<8x1xf32>
    %c0_15 = arith.constant 0 : index
    %c0_16 = arith.constant 0 : index
    %8 = vector.load %arg8[%c0_15, %c0_16] : memref<8x1xf32, #tpu.memory_space<vmem>>, vector<8x1xf32>
    %9 = vector.extract_strided_slice %4 {offsets = [0, 0], sizes = [1, 256], strides = [1, 1]} : vector<2x256xf32> to vector<1x256xf32>
    %10 = vector.broadcast %9 : vector<1x256xf32> to vector<4x256xf32>
    %11 = arith.mulf %1, %10 : vector<4x256xf32>
    %12 = vector.extract_strided_slice %4 {offsets = [1, 0], sizes = [1, 256], strides = [1, 1]} : vector<2x256xf32> to vector<1x256xf32>
    %13 = vector.broadcast %12 : vector<1x256xf32> to vector<4x256xf32>
    %14 = arith.mulf %1, %13 : vector<4x256xf32>
    %cst = arith.constant 0.000000e+00 : f32
    %15 = vector.broadcast %cst : f32 to vector<4x256xf32>
    %16 = vector.extract_strided_slice %2 {offsets = [0, 0, 0], sizes = [1, 4, 1], strides = [1, 1, 1]} : vector<9x4x1xf32> to vector<1x4x1xf32>
    %17 = vector.shape_cast %16 : vector<1x4x1xf32> to vector<4x1xf32>
    %cst_17 = arith.constant 0.000000e+00 : f32
    %18 = vector.broadcast %cst_17 : f32 to vector<4x17xf32>
    %19 = vector.extract_strided_slice %11 {offsets = [0, 0], sizes = [4, 239], strides = [1, 1]} : vector<4x256xf32> to vector<4x239xf32>
    %20 = tpu.concatenate %18, %19 in 1 : vector<4x17xf32>, vector<4x239xf32> -> vector<4x256xf32>
    %21 = vector.broadcast %17 : vector<4x1xf32> to vector<4x256xf32>
    %22 = arith.mulf %20, %21 : vector<4x256xf32>
    %23 = arith.addf %15, %22 : vector<4x256xf32>
    %24 = vector.extract_strided_slice %2 {offsets = [1, 0, 0], sizes = [1, 4, 1], strides = [1, 1, 1]} : vector<9x4x1xf32> to vector<1x4x1xf32>
    %25 = vector.shape_cast %24 : vector<1x4x1xf32> to vector<4x1xf32>
    %cst_18 = arith.constant 0.000000e+00 : f32
    %26 = vector.broadcast %cst_18 : f32 to vector<4x16xf32>
    %27 = vector.extract_strided_slice %1 {offsets = [0, 0], sizes = [4, 240], strides = [1, 1]} : vector<4x256xf32> to vector<4x240xf32>
    %28 = tpu.concatenate %26, %27 in 1 : vector<4x16xf32>, vector<4x240xf32> -> vector<4x256xf32>
    %29 = vector.broadcast %25 : vector<4x1xf32> to vector<4x256xf32>
    %30 = arith.mulf %28, %29 : vector<4x256xf32>
    %31 = arith.addf %23, %30 : vector<4x256xf32>
    %32 = vector.extract_strided_slice %2 {offsets = [2, 0, 0], sizes = [1, 4, 1], strides = [1, 1, 1]} : vector<9x4x1xf32> to vector<1x4x1xf32>
    %33 = vector.shape_cast %32 : vector<1x4x1xf32> to vector<4x1xf32>
    %cst_19 = arith.constant 0.000000e+00 : f32
    %34 = vector.broadcast %cst_19 : f32 to vector<4x15xf32>
    %35 = vector.extract_strided_slice %14 {offsets = [0, 0], sizes = [4, 241], strides = [1, 1]} : vector<4x256xf32> to vector<4x241xf32>
    %36 = tpu.concatenate %34, %35 in 1 : vector<4x15xf32>, vector<4x241xf32> -> vector<4x256xf32>
    %37 = vector.broadcast %33 : vector<4x1xf32> to vector<4x256xf32>
    %38 = arith.mulf %36, %37 : vector<4x256xf32>
    %39 = arith.addf %31, %38 : vector<4x256xf32>
    %40 = vector.extract_strided_slice %2 {offsets = [3, 0, 0], sizes = [1, 4, 1], strides = [1, 1, 1]} : vector<9x4x1xf32> to vector<1x4x1xf32>
    %41 = vector.shape_cast %40 : vector<1x4x1xf32> to vector<4x1xf32>
    %cst_20 = arith.constant 0.000000e+00 : f32
    %42 = vector.broadcast %cst_20 : f32 to vector<4x1xf32>
    %43 = vector.extract_strided_slice %11 {offsets = [0, 0], sizes = [4, 255], strides = [1, 1]} : vector<4x256xf32> to vector<4x255xf32>
    %44 = tpu.concatenate %42, %43 in 1 : vector<4x1xf32>, vector<4x255xf32> -> vector<4x256xf32>
    %45 = vector.broadcast %41 : vector<4x1xf32> to vector<4x256xf32>
    %46 = arith.mulf %44, %45 : vector<4x256xf32>
    %47 = arith.addf %39, %46 : vector<4x256xf32>
    %48 = vector.extract_strided_slice %2 {offsets = [4, 0, 0], sizes = [1, 4, 1], strides = [1, 1, 1]} : vector<9x4x1xf32> to vector<1x4x1xf32>
    %49 = vector.shape_cast %48 : vector<1x4x1xf32> to vector<4x1xf32>
    %50 = vector.broadcast %49 : vector<4x1xf32> to vector<4x256xf32>
    %51 = arith.mulf %1, %50 : vector<4x256xf32>
    %52 = arith.addf %47, %51 : vector<4x256xf32>
    %53 = vector.extract_strided_slice %2 {offsets = [5, 0, 0], sizes = [1, 4, 1], strides = [1, 1, 1]} : vector<9x4x1xf32> to vector<1x4x1xf32>
    %54 = vector.shape_cast %53 : vector<1x4x1xf32> to vector<4x1xf32>
    %cst_21 = arith.constant 0.000000e+00 : f32
    %55 = vector.broadcast %cst_21 : f32 to vector<4x1xf32>
    %56 = vector.extract_strided_slice %14 {offsets = [0, 1], sizes = [4, 255], strides = [1, 1]} : vector<4x256xf32> to vector<4x255xf32>
    %57 = tpu.concatenate %56, %55 in 1 : vector<4x255xf32>, vector<4x1xf32> -> vector<4x256xf32>
    %58 = vector.broadcast %54 : vector<4x1xf32> to vector<4x256xf32>
    %59 = arith.mulf %57, %58 : vector<4x256xf32>
    %60 = arith.addf %52, %59 : vector<4x256xf32>
    %61 = vector.extract_strided_slice %2 {offsets = [6, 0, 0], sizes = [1, 4, 1], strides = [1, 1, 1]} : vector<9x4x1xf32> to vector<1x4x1xf32>
    %62 = vector.shape_cast %61 : vector<1x4x1xf32> to vector<4x1xf32>
    %cst_22 = arith.constant 0.000000e+00 : f32
    %63 = vector.broadcast %cst_22 : f32 to vector<4x15xf32>
    %64 = vector.extract_strided_slice %11 {offsets = [0, 15], sizes = [4, 241], strides = [1, 1]} : vector<4x256xf32> to vector<4x241xf32>
    %65 = tpu.concatenate %64, %63 in 1 : vector<4x241xf32>, vector<4x15xf32> -> vector<4x256xf32>
    %66 = vector.broadcast %62 : vector<4x1xf32> to vector<4x256xf32>
    %67 = arith.mulf %65, %66 : vector<4x256xf32>
    %68 = arith.addf %60, %67 : vector<4x256xf32>
    %69 = vector.extract_strided_slice %2 {offsets = [7, 0, 0], sizes = [1, 4, 1], strides = [1, 1, 1]} : vector<9x4x1xf32> to vector<1x4x1xf32>
    %70 = vector.shape_cast %69 : vector<1x4x1xf32> to vector<4x1xf32>
    %cst_23 = arith.constant 0.000000e+00 : f32
    %71 = vector.broadcast %cst_23 : f32 to vector<4x16xf32>
    %72 = vector.extract_strided_slice %1 {offsets = [0, 16], sizes = [4, 240], strides = [1, 1]} : vector<4x256xf32> to vector<4x240xf32>
    %73 = tpu.concatenate %72, %71 in 1 : vector<4x240xf32>, vector<4x16xf32> -> vector<4x256xf32>
    %74 = vector.broadcast %70 : vector<4x1xf32> to vector<4x256xf32>
    %75 = arith.mulf %73, %74 : vector<4x256xf32>
    %76 = arith.addf %68, %75 : vector<4x256xf32>
    %77 = vector.extract_strided_slice %2 {offsets = [8, 0, 0], sizes = [1, 4, 1], strides = [1, 1, 1]} : vector<9x4x1xf32> to vector<1x4x1xf32>
    %78 = vector.shape_cast %77 : vector<1x4x1xf32> to vector<4x1xf32>
    %cst_24 = arith.constant 0.000000e+00 : f32
    %79 = vector.broadcast %cst_24 : f32 to vector<4x17xf32>
    %80 = vector.extract_strided_slice %14 {offsets = [0, 17], sizes = [4, 239], strides = [1, 1]} : vector<4x256xf32> to vector<4x239xf32>
    %81 = tpu.concatenate %80, %79 in 1 : vector<4x239xf32>, vector<4x17xf32> -> vector<4x256xf32>
    %82 = vector.broadcast %78 : vector<4x1xf32> to vector<4x256xf32>
    %83 = arith.mulf %81, %82 : vector<4x256xf32>
    %84 = arith.addf %76, %83 : vector<4x256xf32>
    %85 = arith.mulf %84, %84 : vector<4x256xf32>
    %cst_25 = arith.constant dense<0.000000e+00> : vector<4xf32>
    %86 = vector.multi_reduction <add>, %84, %cst_25 [1] : vector<4x256xf32> to vector<4xf32>
    %87 = vector.shape_cast %86 : vector<4xf32> to vector<4x1xf32>
    %cst_26 = arith.constant dense<0.000000e+00> : vector<4xf32>
    %88 = vector.multi_reduction <add>, %85, %cst_26 [1] : vector<4x256xf32> to vector<4xf32>
    %89 = vector.shape_cast %88 : vector<4xf32> to vector<4x1xf32>
    %cst_27 = arith.constant 3.906250e-03 : f32
    %90 = vector.broadcast %cst_27 : f32 to vector<4x1xf32>
    %91 = arith.mulf %87, %90 : vector<4x1xf32>
    %cst_28 = arith.constant 3.906250e-03 : f32
    %92 = vector.broadcast %cst_28 : f32 to vector<4x1xf32>
    %93 = arith.mulf %89, %92 : vector<4x1xf32>
    %94 = arith.mulf %91, %91 : vector<4x1xf32>
    %95 = arith.subf %93, %94 : vector<4x1xf32>
    %cst_29 = arith.constant 0.000000e+00 : f32
    %96 = vector.broadcast %cst_29 : f32 to vector<4x1xf32>
    %97 = arith.maximumf %95, %96 : vector<4x1xf32>
    %98 = vector.broadcast %91 : vector<4x1xf32> to vector<4x256xf32>
    %99 = arith.subf %84, %98 : vector<4x256xf32>
    %cst_30 = arith.constant 9.99999974E-6 : f32
    %100 = vector.broadcast %cst_30 : f32 to vector<4x1xf32>
    %101 = arith.addf %97, %100 : vector<4x1xf32>
    %102 = math.rsqrt %101 : vector<4x1xf32>
    %103 = vector.broadcast %102 : vector<4x1xf32> to vector<4x256xf32>
    %104 = arith.mulf %99, %103 : vector<4x256xf32>
    %105 = vector.broadcast %5 : vector<4x1xf32> to vector<4x256xf32>
    %106 = arith.mulf %104, %105 : vector<4x256xf32>
    %107 = vector.broadcast %6 : vector<4x1xf32> to vector<4x256xf32>
    %108 = arith.addf %106, %107 : vector<4x256xf32>
    %cst_31 = arith.constant 0.000000e+00 : f32
    %109 = vector.broadcast %cst_31 : f32 to vector<4x256xf32>
    %110 = arith.maximumf %108, %109 : vector<4x256xf32>
    %cst_32 = arith.constant 0.000000e+00 : f32
    %111 = vector.broadcast %cst_32 : f32 to vector<8x256xf32>
    %112 = vector.extract_strided_slice %3 {offsets = [0, 0], sizes = [8, 1], strides = [1, 1]} : vector<8x4xf32> to vector<8x1xf32>
    %113 = vector.extract_strided_slice %110 {offsets = [0, 0], sizes = [1, 256], strides = [1, 1]} : vector<4x256xf32> to vector<1x256xf32>
    %114 = vector.broadcast %112 : vector<8x1xf32> to vector<8x256xf32>
    %115 = vector.broadcast %113 : vector<1x256xf32> to vector<8x256xf32>
    %116 = arith.mulf %114, %115 : vector<8x256xf32>
    %117 = arith.addf %111, %116 : vector<8x256xf32>
    %118 = vector.extract_strided_slice %3 {offsets = [0, 1], sizes = [8, 1], strides = [1, 1]} : vector<8x4xf32> to vector<8x1xf32>
    %119 = vector.extract_strided_slice %110 {offsets = [1, 0], sizes = [1, 256], strides = [1, 1]} : vector<4x256xf32> to vector<1x256xf32>
    %120 = vector.broadcast %118 : vector<8x1xf32> to vector<8x256xf32>
    %121 = vector.broadcast %119 : vector<1x256xf32> to vector<8x256xf32>
    %122 = arith.mulf %120, %121 : vector<8x256xf32>
    %123 = arith.addf %117, %122 : vector<8x256xf32>
    %124 = vector.extract_strided_slice %3 {offsets = [0, 2], sizes = [8, 1], strides = [1, 1]} : vector<8x4xf32> to vector<8x1xf32>
    %125 = vector.extract_strided_slice %110 {offsets = [2, 0], sizes = [1, 256], strides = [1, 1]} : vector<4x256xf32> to vector<1x256xf32>
    %126 = vector.broadcast %124 : vector<8x1xf32> to vector<8x256xf32>
    %127 = vector.broadcast %125 : vector<1x256xf32> to vector<8x256xf32>
    %128 = arith.mulf %126, %127 : vector<8x256xf32>
    %129 = arith.addf %123, %128 : vector<8x256xf32>
    %130 = vector.extract_strided_slice %3 {offsets = [0, 3], sizes = [8, 1], strides = [1, 1]} : vector<8x4xf32> to vector<8x1xf32>
    %131 = vector.extract_strided_slice %110 {offsets = [3, 0], sizes = [1, 256], strides = [1, 1]} : vector<4x256xf32> to vector<1x256xf32>
    %132 = vector.broadcast %130 : vector<8x1xf32> to vector<8x256xf32>
    %133 = vector.broadcast %131 : vector<1x256xf32> to vector<8x256xf32>
    %134 = arith.mulf %132, %133 : vector<8x256xf32>
    %135 = arith.addf %129, %134 : vector<8x256xf32>
    %136 = arith.mulf %135, %135 : vector<8x256xf32>
    %cst_33 = arith.constant dense<0.000000e+00> : vector<8xf32>
    %137 = vector.multi_reduction <add>, %135, %cst_33 [1] : vector<8x256xf32> to vector<8xf32>
    %138 = vector.shape_cast %137 : vector<8xf32> to vector<8x1xf32>
    %cst_34 = arith.constant dense<0.000000e+00> : vector<8xf32>
    %139 = vector.multi_reduction <add>, %136, %cst_34 [1] : vector<8x256xf32> to vector<8xf32>
    %140 = vector.shape_cast %139 : vector<8xf32> to vector<8x1xf32>
    %cst_35 = arith.constant 3.906250e-03 : f32
    %141 = vector.broadcast %cst_35 : f32 to vector<8x1xf32>
    %142 = arith.mulf %138, %141 : vector<8x1xf32>
    %cst_36 = arith.constant 3.906250e-03 : f32
    %143 = vector.broadcast %cst_36 : f32 to vector<8x1xf32>
    %144 = arith.mulf %140, %143 : vector<8x1xf32>
    %145 = arith.mulf %142, %142 : vector<8x1xf32>
    %146 = arith.subf %144, %145 : vector<8x1xf32>
    %cst_37 = arith.constant 0.000000e+00 : f32
    %147 = vector.broadcast %cst_37 : f32 to vector<8x1xf32>
    %148 = arith.maximumf %146, %147 : vector<8x1xf32>
    %149 = vector.broadcast %142 : vector<8x1xf32> to vector<8x256xf32>
    %150 = arith.subf %135, %149 : vector<8x256xf32>
    %cst_38 = arith.constant 9.99999974E-6 : f32
    %151 = vector.broadcast %cst_38 : f32 to vector<8x1xf32>
    %152 = arith.addf %148, %151 : vector<8x1xf32>
    %153 = math.rsqrt %152 : vector<8x1xf32>
    %154 = vector.broadcast %153 : vector<8x1xf32> to vector<8x256xf32>
    %155 = arith.mulf %150, %154 : vector<8x256xf32>
    %156 = vector.broadcast %7 : vector<8x1xf32> to vector<8x256xf32>
    %157 = arith.mulf %155, %156 : vector<8x256xf32>
    %158 = vector.broadcast %8 : vector<8x1xf32> to vector<8x256xf32>
    %159 = arith.addf %157, %158 : vector<8x256xf32>
    %cst_39 = arith.constant 0.000000e+00 : f32
    %160 = vector.broadcast %cst_39 : f32 to vector<8x256xf32>
    %161 = arith.maximumf %159, %160 : vector<8x256xf32>
    %c0_40 = arith.constant 0 : index
    %c0_41 = arith.constant 0 : index
    %c0_42 = arith.constant 0 : index
    %162 = vector.load %arg9[%c0_40, %c0_41, %c0_42] : memref<1x8x256xf32, #tpu.memory_space<vmem>>, vector<1x8x256xf32>
    %163 = vector.shape_cast %162 : vector<1x8x256xf32> to vector<8x256xf32>
    %164 = vector.shape_cast %161 : vector<8x256xf32> to vector<1x8x256xf32>
    tpu.vector_store %arg9[%c0_40, %c0_41, %c0_42], %164 {strides = array<i32>} : memref<1x8x256xf32, #tpu.memory_space<vmem>>, vector<1x8x256xf32>,
    return
  }
  func.func @transform_0(%arg0: i32) -> (i32, i32, i32) {
    %c0_i32 = arith.constant 0 : i32
    %c0_i32_0 = arith.constant 0 : i32
    %c0_i32_1 = arith.constant 0 : i32
    return %arg0, %c0_i32, %c0_i32_0 : i32, i32, i32
  }
  func.func @transform_1(%arg0: i32) -> (i32, i32, i32) {
    %c0_i32 = arith.constant 0 : i32
    %c0_i32_0 = arith.constant 0 : i32
    %c0_i32_1 = arith.constant 0 : i32
    %c0_i32_2 = arith.constant 0 : i32
    return %c0_i32, %c0_i32_0, %c0_i32_1 : i32, i32, i32
  }
  func.func @transform_2(%arg0: i32) -> (i32, i32) {
    %c0_i32 = arith.constant 0 : i32
    %c0_i32_0 = arith.constant 0 : i32
    %c0_i32_1 = arith.constant 0 : i32
    return %c0_i32, %c0_i32_0 : i32, i32
  }
  func.func @transform_3(%arg0: i32) -> (i32, i32) {
    %c0_i32 = arith.constant 0 : i32
    %c0_i32_0 = arith.constant 0 : i32
    %c0_i32_1 = arith.constant 0 : i32
    return %c0_i32, %c0_i32_0 : i32, i32
  }
  func.func @transform_4(%arg0: i32) -> (i32, i32) {
    %c0_i32 = arith.constant 0 : i32
    %c0_i32_0 = arith.constant 0 : i32
    %c0_i32_1 = arith.constant 0 : i32
    return %c0_i32, %c0_i32_0 : i32, i32
  }
  func.func @transform_5(%arg0: i32) -> (i32, i32) {
    %c0_i32 = arith.constant 0 : i32
    %c0_i32_0 = arith.constant 0 : i32
    %c0_i32_1 = arith.constant 0 : i32
    return %c0_i32, %c0_i32_0 : i32, i32
  }
  func.func @transform_6(%arg0: i32) -> (i32, i32) {
    %c0_i32 = arith.constant 0 : i32
    %c0_i32_0 = arith.constant 0 : i32
    %c0_i32_1 = arith.constant 0 : i32
    return %c0_i32, %c0_i32_0 : i32, i32
  }
  func.func @transform_7(%arg0: i32) -> (i32, i32) {
    %c0_i32 = arith.constant 0 : i32
    %c0_i32_0 = arith.constant 0 : i32
    %c0_i32_1 = arith.constant 0 : i32
    return %c0_i32, %c0_i32_0 : i32, i32
  }
  func.func @transform_8(%arg0: i32) -> (i32, i32, i32) {
    %c0_i32 = arith.constant 0 : i32
    %c0_i32_0 = arith.constant 0 : i32
    %c0_i32_1 = arith.constant 0 : i32
    return %arg0, %c0_i32, %c0_i32_0 : i32, i32, i32
  }
}

</mosaic_0001>

<llo_original>
// kernel: tpu_custom_call.1
$region0: #{tpu_custom_call.1}
  #allocation0 [shape = 'u32[]', space=smem, size = 0x4, offset = 0x4, fixed_abs, tag = 'smem constant byte address 0x4 - core index']
  #allocation1 [shape = 'u32[144,128]{1,0:T(1,128)}', space=vmem, size = 0x12000, scoped, tag = 'internal scratch']
  %s0 = inlined_call_operand.vmem [shape: f32[2,4,256], index: 0, kind: input, shape index: {}]
  %s1 = inlined_call_operand.vmem [shape: f32[9,4,1], index: 1, kind: input, shape index: {}]
  %s2 = inlined_call_operand.vmem [shape: f32[8,4], index: 2, kind: input, shape index: {}]
  %s3 = inlined_call_operand.vmem [shape: f32[2,256], index: 3, kind: input, shape index: {}]
  %s4 = inlined_call_operand.vmem [shape: f32[4,1], index: 4, kind: input, shape index: {}]
  %s5 = inlined_call_operand.vmem [shape: f32[4,1], index: 5, kind: input, shape index: {}]
  %s6 = inlined_call_operand.vmem [shape: f32[8,1], index: 6, kind: input, shape index: {}]
  %s7 = inlined_call_operand.vmem [shape: f32[8,1], index: 7, kind: input, shape index: {}]
  %s8 = inlined_call_operand.hbm [shape: f32[2,8,256], index: 8, kind: output, shape index: {}]
  %s9 = sld [smem:[#allocation0]]
  $region65: #{tpu_custom_call.1} parent=0
    _
  %s11 = ssub.s32 1, %s9
  %s12 = scalar_select 0, %s11, %s9
  $region1: #{tpu_custom_call.1} parent=0
    #allocation2 [shape = 'u8[16384]{0}', space=vmem, size = 0x4000, scoped, tag = 'output window, operand 0']
    #allocation3 [shape = 's32[2]{0}', space=sflag, size = 0x8, scoped, tag = 'scoped memory for tpu_custom_call.1']
    %13 = vsyncpa [#allocation3], 0
    %s14 = scalar_lea.sflag [#allocation3], 1
    %15 = vsyncpa %s14, 0
    loop: start=0, step=1, limit=4
    $region2: #{tpu_custom_call.1} parent=1 // loop_pre_header
      _
    $region3: #{tpu_custom_call.1} parent=1 // loop_header
      %s17 = sphi 0, %s21
      %p18 = scmp.ge.s32.totalorder %s17, 4
      %s27 = sphi 0, %s29
      %s30 = sphi 0, %s27
      %s31 = sphi 0, %s30
      %s47 = sphi 0, %s31
      %s51 = sphi 0, %s51
      %s53 = sphi 0, %s51
      %s54 = sphi 0, %s53
      %s68 = sphi 0, %s54
      %s72 = sphi 0, %s72
      %s74 = sphi 0, %s72
      %s75 = sphi 0, %s74
      %s89 = sphi 0, %s75
      %s93 = sphi 0, %s93
      %s95 = sphi 0, %s93
      %s96 = sphi 0, %s95
      %s110 = sphi 0, %s96
      %s114 = sphi 0, %s114
      %s116 = sphi 0, %s114
      %s117 = sphi 0, %s116
      %s131 = sphi 0, %s117
      %s135 = sphi 0, %s135
      %s137 = sphi 0, %s135
      %s138 = sphi 0, %s137
      %s152 = sphi 0, %s138
      %s156 = sphi 0, %s156
      %s158 = sphi 0, %s156
      %s159 = sphi 0, %s158
      %s173 = sphi 0, %s159
      %s177 = sphi 0, %s177
      %s179 = sphi 0, %s177
      %s180 = sphi 0, %s179
      %s194 = sphi 0, %s180
      %s200 = sphi 0, %s202
      %s203 = sphi 0, %s200
      %s204 = sphi 0, %s203
      %s220 = sphi 0, %s204
    $region4: #{tpu_custom_call.1} parent=1 // loop_header_branch
      %20 = sbr.rel (%p18) target = $region8
    $region5: #{tpu_custom_call.1} parent=1 // loop_body
      %s22 = ssub.s32 %s17, 1
      %s23 = ssub.s32 %s17, 2
      %s24 = sadd.s32 %s17, 1
      %s25 = ssub.s32 %s17, %s24
      %p26 = scmp.eq.s32.totalorder %s25, 0
      %s28 = sadd.s32 %s27, 1
      %s29 = scalar_select %p26, %s27, %s28
      %p32 = pneg %p26
      %p33 = scmp.eq.s32.totalorder %s17, 1
      %p34 = por %p32, %p33
      %p35 = scmp.ne.s32.totalorder %s27, %s30
      %p36 = scmp.eq.s32.totalorder %s17, 0
      %p37 = por %p35, %p36
      %p38 = scmp.ne.s32.totalorder %s27, %s30
      %p39 = scmp.eq.s32.totalorder %s22, 1
      %p40 = por %p38, %p39
      %p41 = scmp.ne.s32.totalorder %s30, %s31
      %p42 = scmp.eq.s32.totalorder %s22, 0
      %p43 = por %p41, %p42
      %p44 = scmp.ne.s32.totalorder %s30, %s31
      %p45 = scmp.eq.s32.totalorder %s23, 1
      %p46 = por %p44, %p45
      %p48 = scmp.ne.s32.totalorder %s31, %s47
      %p49 = scmp.eq.s32.totalorder %s23, 0
      %p50 = por %p48, %p49
      %s52 = sadd.s32 %s51, 1
      %p55 = scmp.eq.s32.totalorder %s17, 1
      %p56 = scmp.ne.s32.totalorder %s51, %s53
      %p57 = scmp.eq.s32.totalorder %s17, 0
      %p58 = por %p56, %p57
      %p59 = scmp.ne.s32.totalorder %s51, %s53
      %p60 = scmp.eq.s32.totalorder %s22, 1
      %p61 = por %p59, %p60
      %p62 = scmp.ne.s32.totalorder %s53, %s54
      %p63 = scmp.eq.s32.totalorder %s22, 0
      %p64 = por %p62, %p63
      %p65 = scmp.ne.s32.totalorder %s53, %s54
      %p66 = scmp.eq.s32.totalorder %s23, 1
      %p67 = por %p65, %p66
      %p69 = scmp.ne.s32.totalorder %s54, %s68
      %p70 = scmp.eq.s32.totalorder %s23, 0
      %p71 = por %p69, %p70
      %s73 = sadd.s32 %s72, 1
      %p76 = scmp.eq.s32.totalorder %s17, 1
      %p77 = scmp.ne.s32.totalorder %s72, %s74
      %p78 = scmp.eq.s32.totalorder %s17, 0
      %p79 = por %p77, %p78
      %p80 = scmp.ne.s32.totalorder %s72, %s74
      %p81 = scmp.eq.s32.totalorder %s22, 1
      %p82 = por %p80, %p81
      %p83 = scmp.ne.s32.totalorder %s74, %s75
      %p84 = scmp.eq.s32.totalorder %s22, 0
      %p85 = por %p83, %p84
      %p86 = scmp.ne.s32.totalorder %s74, %s75
      %p87 = scmp.eq.s32.totalorder %s23, 1
      %p88 = por %p86, %p87
      %p90 = scmp.ne.s32.totalorder %s75, %s89
      %p91 = scmp.eq.s32.totalorder %s23, 0
      %p92 = por %p90, %p91
      %s94 = sadd.s32 %s93, 1
      %p97 = scmp.eq.s32.totalorder %s17, 1
      %p98 = scmp.ne.s32.totalorder %s93, %s95
      %p99 = scmp.eq.s32.totalorder %s17, 0
      %p100 = por %p98, %p99
      %p101 = scmp.ne.s32.totalorder %s93, %s95
      %p102 = scmp.eq.s32.totalorder %s22, 1
      %p103 = por %p101, %p102
      %p104 = scmp.ne.s32.totalorder %s95, %s96
      %p105 = scmp.eq.s32.totalorder %s22, 0
      %p106 = por %p104, %p105
      %p107 = scmp.ne.s32.totalorder %s95, %s96
      %p108 = scmp.eq.s32.totalorder %s23, 1
      %p109 = por %p107, %p108
      %p111 = scmp.ne.s32.totalorder %s96, %s110
      %p112 = scmp.eq.s32.totalorder %s23, 0
      %p113 = por %p111, %p112
      %s115 = sadd.s32 %s114, 1
      %p118 = scmp.eq.s32.totalorder %s17, 1
      %p119 = scmp.ne.s32.totalorder %s114, %s116
      %p120 = scmp.eq.s32.totalorder %s17, 0
      %p121 = por %p119, %p120
      %p122 = scmp.ne.s32.totalorder %s114, %s116
      %p123 = scmp.eq.s32.totalorder %s22, 1
      %p124 = por %p122, %p123
      %p125 = scmp.ne.s32.totalorder %s116, %s117
      %p126 = scmp.eq.s32.totalorder %s22, 0
      %p127 = por %p125, %p126
      %p128 = scmp.ne.s32.totalorder %s116, %s117
      %p129 = scmp.eq.s32.totalorder %s23, 1
      %p130 = por %p128, %p129
      %p132 = scmp.ne.s32.totalorder %s117, %s131
      %p133 = scmp.eq.s32.totalorder %s23, 0
      %p134 = por %p132, %p133
      %s136 = sadd.s32 %s135, 1
      %p139 = scmp.eq.s32.totalorder %s17, 1
      %p140 = scmp.ne.s32.totalorder %s135, %s137
      %p141 = scmp.eq.s32.totalorder %s17, 0
      %p142 = por %p140, %p141
      %p143 = scmp.ne.s32.totalorder %s135, %s137
      %p144 = scmp.eq.s32.totalorder %s22, 1
      %p145 = por %p143, %p144
      %p146 = scmp.ne.s32.totalorder %s137, %s138
      %p147 = scmp.eq.s32.totalorder %s22, 0
      %p148 = por %p146, %p147
      %p149 = scmp.ne.s32.totalorder %s137, %s138
      %p150 = scmp.eq.s32.totalorder %s23, 1
      %p151 = por %p149, %p150
      %p153 = scmp.ne.s32.totalorder %s138, %s152
      %p154 = scmp.eq.s32.totalorder %s23, 0
      %p155 = por %p153, %p154
      %s157 = sadd.s32 %s156, 1
      %p160 = scmp.eq.s32.totalorder %s17, 1
      %p161 = scmp.ne.s32.totalorder %s156, %s158
      %p162 = scmp.eq.s32.totalorder %s17, 0
      %p163 = por %p161, %p162
      %p164 = scmp.ne.s32.totalorder %s156, %s158
      %p165 = scmp.eq.s32.totalorder %s22, 1
      %p166 = por %p164, %p165
      %p167 = scmp.ne.s32.totalorder %s158, %s159
      %p168 = scmp.eq.s32.totalorder %s22, 0
      %p169 = por %p167, %p168
      %p170 = scmp.ne.s32.totalorder %s158, %s159
      %p171 = scmp.eq.s32.totalorder %s23, 1
      %p172 = por %p170, %p171
      %p174 = scmp.ne.s32.totalorder %s159, %s173
      %p175 = scmp.eq.s32.totalorder %s23, 0
      %p176 = por %p174, %p175
      %s178 = sadd.s32 %s177, 1
      %p181 = scmp.eq.s32.totalorder %s17, 1
      %p182 = scmp.ne.s32.totalorder %s177, %s179
      %p183 = scmp.eq.s32.totalorder %s17, 0
      %p184 = por %p182, %p183
      %p185 = scmp.ne.s32.totalorder %s177, %s179
      %p186 = scmp.eq.s32.totalorder %s22, 1
      %p187 = por %p185, %p186
      %p188 = scmp.ne.s32.totalorder %s179, %s180
      %p189 = scmp.eq.s32.totalorder %s22, 0
      %p190 = por %p188, %p189
      %p191 = scmp.ne.s32.totalorder %s179, %s180
      %p192 = scmp.eq.s32.totalorder %s23, 1
      %p193 = por %p191, %p192
      %p195 = scmp.ne.s32.totalorder %s180, %s194
      %p196 = scmp.eq.s32.totalorder %s23, 0
      %p197 = por %p195, %p196
      %s198 = ssub.s32 %s17, %s24
      %p199 = scmp.eq.s32.totalorder %s198, 0
      %s201 = sadd.s32 %s200, 1
      %s202 = scalar_select %p199, %s200, %s201
      %p205 = pneg %p199
      %p206 = scmp.eq.s32.totalorder %s17, 1
      %p207 = por %p205, %p206
      %p208 = scmp.ne.s32.totalorder %s200, %s203
      %p209 = scmp.eq.s32.totalorder %s17, 0
      %p210 = por %p208, %p209
      %p211 = scmp.ne.s32.totalorder %s200, %s203
      %p212 = scmp.eq.s32.totalorder %s22, 1
      %p213 = por %p211, %p212
      %p214 = scmp.ne.s32.totalorder %s203, %s204
      %p215 = scmp.eq.s32.totalorder %s22, 0
      %p216 = por %p214, %p215
      %p217 = scmp.ne.s32.totalorder %s203, %s204
      %p218 = scmp.eq.s32.totalorder %s23, 1
      %p219 = por %p217, %p218
      %p221 = scmp.ne.s32.totalorder %s204, %s220
      %p222 = scmp.eq.s32.totalorder %s23, 0
      %p223 = por %p221, %p222
      %p224 = scmp.le.s32.totalorder 1, %s17
      %p225 = scmp.lt.s32.totalorder %s17, 3
      %p226 = pnand %p224, %p225
      %p227 = pneg %p226
      // Predicated region
      $region9: #{tpu_custom_call.1} parent=5 // pred_check
        _
      $region10: #{tpu_custom_call.1} parent=5 // pred_check_branch
        %229 = sbr.rel (%p226) target = $region12
      $region11: #{tpu_custom_call.1} parent=5 // pred_region
        %s230 = ssub.s32 %s17, 1
        // Predicated region
        $region13: #{tpu_custom_call.1} parent=11 // pred_check
          %p231 = pneg %p64
        $region14: #{tpu_custom_call.1} parent=11 // pred_check_branch
          %233 = sbr.rel (%p231) target = $region16
        $region15: #{tpu_custom_call.1} parent=11 // pred_region
          _
        $region16: #{tpu_custom_call.1} parent=11 // pred_fallthru
          _
        // Predicated region
        $region17: #{tpu_custom_call.1} parent=11 // pred_check
          %p234 = pneg %p85
        $region18: #{tpu_custom_call.1} parent=11 // pred_check_branch
          %236 = sbr.rel (%p234) target = $region20
        $region19: #{tpu_custom_call.1} parent=11 // pred_region
          _
        $region20: #{tpu_custom_call.1} parent=11 // pred_fallthru
          _
        // Predicated region
        $region21: #{tpu_custom_call.1} parent=11 // pred_check
          %p237 = pneg %p106
        $region22: #{tpu_custom_call.1} parent=11 // pred_check_branch
          %239 = sbr.rel (%p237) target = $region24
        $region23: #{tpu_custom_call.1} parent=11 // pred_region
          _
        $region24: #{tpu_custom_call.1} parent=11 // pred_fallthru
          _
        // Predicated region
        $region25: #{tpu_custom_call.1} parent=11 // pred_check
          %p240 = pneg %p127
        $region26: #{tpu_custom_call.1} parent=11 // pred_check_branch
          %242 = sbr.rel (%p240) target = $region28
        $region27: #{tpu_custom_call.1} parent=11 // pred_region
          _
        $region28: #{tpu_custom_call.1} parent=11 // pred_fallthru
          _
        // Predicated region
        $region29: #{tpu_custom_call.1} parent=11 // pred_check
          %p243 = pneg %p148
        $region30: #{tpu_custom_call.1} parent=11 // pred_check_branch
          %245 = sbr.rel (%p243) target = $region32
        $region31: #{tpu_custom_call.1} parent=11 // pred_region
          _
        $region32: #{tpu_custom_call.1} parent=11 // pred_fallthru
          _
        // Predicated region
        $region33: #{tpu_custom_call.1} parent=11 // pred_check
          %p246 = pneg %p169
        $region34: #{tpu_custom_call.1} parent=11 // pred_check_branch
          %248 = sbr.rel (%p246) target = $region36
        $region35: #{tpu_custom_call.1} parent=11 // pred_region
          _
        $region36: #{tpu_custom_call.1} parent=11 // pred_fallthru
          _
        // Predicated region
        $region37: #{tpu_custom_call.1} parent=11 // pred_check
          %p249 = pneg %p190
        $region38: #{tpu_custom_call.1} parent=11 // pred_check_branch
          %251 = sbr.rel (%p249) target = $region40
        $region39: #{tpu_custom_call.1} parent=11 // pred_region
          _
        $region40: #{tpu_custom_call.1} parent=11 // pred_fallthru
          _
      $region12: #{tpu_custom_call.1} parent=5 // pred_fallthru
        _
      %p252 = scmp.lt.s32.totalorder %s17, 2
      // Predicated region
      $region41: #{tpu_custom_call.1} parent=5 // pred_check
        %p253 = pneg %p252
      $region42: #{tpu_custom_call.1} parent=5 // pred_check_branch
        %255 = sbr.rel (%p253) target = $region44
      $region43: #{tpu_custom_call.1} parent=5 // pred_region
        // Predicated region
        $region45: #{tpu_custom_call.1} parent=43 // pred_check
          %p256 = pneg %p37
        $region46: #{tpu_custom_call.1} parent=43 // pred_check_branch
          %258 = sbr.rel (%p256) target = $region48
        $region47: #{tpu_custom_call.1} parent=43 // pred_region
          %p259 = scmp.lt.s32.totalorder %s17, 1
          %s260 = scalar_select %p259, %s17, 1
          %s261 = smul.addr %s260, 2
          %s262 = smul.addr %s261, 4
          %s263 = scalar_lea.vmem %s0, %s262
        $region48: #{tpu_custom_call.1} parent=43 // pred_fallthru
          _
      $region44: #{tpu_custom_call.1} parent=5 // pred_fallthru
        _
      %p264 = scmp.le.s32.totalorder 1, %s17
      %p265 = scmp.lt.s32.totalorder %s17, 3
      %p266 = pnand %p264, %p265
      %p267 = pneg %p266
      // Predicated region
      $region49: #{tpu_custom_call.1} parent=5 // pred_check
        _
      $region50: #{tpu_custom_call.1} parent=5 // pred_check_branch
        %269 = sbr.rel (%p266) target = $region52
      $region51: #{tpu_custom_call.1} parent=5 // pred_region
        %s270 = ssub.s32 %s17, 1
        %p271 = scmp.lt.s32.totalorder %s22, 1
        %s272 = scalar_select %p271, %s22, 1
        %s273 = smul.addr %s272, 2
        %s274 = smul.addr %s273, 4
        %s275 = scalar_lea.vmem %s0, %s274
        %p276 = pneg %p43
        %p277 = pneg %p40
        %p278 = pneg %p64
        %p279 = pneg %p61
        %p280 = pneg %p85
        %p281 = pneg %p82
        %p282 = pneg %p106
        %p283 = pneg %p103
        %p284 = pneg %p127
        %p285 = pneg %p124
        %p286 = pneg %p148
        %p287 = pneg %p145
        %p288 = pneg %p169
        %p289 = pneg %p166
        %p290 = pneg %p190
        %p291 = pneg %p187
        %p292 = pneg %p216
        %p293 = pneg %p213
        %s294 = sand.u32 %s203, 1
        %s295 = scalar_lea.sflag [#allocation3], %s294
        %s296 = sand.u32 %s203, 1
        %s297 = smul.addr %s296, 16
        %s298 = scalar_lea.vmem [#allocation2], %s297
        %p299 = scmp.lt.s32.totalorder %s22, 1
        %s300 = scalar_select %p299, %s22, 1
        %s301 = smul.addr %s300, 2
        %s302 = smul.addr %s301, 4
        %s303 = scalar_lea.vmem %s0, %s302
        %v304 = vld [vmem:[%s303] sm:$0xff]
        %v305 = vld [vmem:[%s1] sm:$0xf]
        %v306 = vld [vmem:[%s1 + $0x4] sm:$0xf]
        %v307 = vld [vmem:[%s1 + $0x8] sm:$0xf]
        %v308 = vld [vmem:[%s1 + $0xc] sm:$0xf]
        %v309 = vld [vmem:[%s1 + $0x10] sm:$0xf]
        %v310 = vld [vmem:[%s1 + $0x14] sm:$0xf]
        %v311 = vld [vmem:[%s1 + $0x18] sm:$0xf]
        %v312 = vld [vmem:[%s1 + $0x1c] sm:$0xf]
        %v313 = vld [vmem:[%s1 + $0x20] sm:$0xf]
        %v314 = vld [vmem:[%s2] sm:$0xff]
        %v315 = vld [vmem:[%s3] sm:$0xf]
        %v316 = vld [vmem:[%s4] sm:$0xf]
        %v317 = vld [vmem:[%s5] sm:$0xf]
        %v318 = vld [vmem:[%s6] sm:$0xff]
        %v319 = vld [vmem:[%s7] sm:$0xff]
        %v321 = vlaneseq
        %v322 = vshrl.u32 %v321, 7
        %v323 = vsub.s32 0, %v322
        %v324 = vrot.slane %v315, %v323
        %v325 = vlaneseq
        %v326 = vshrl.u32 %v325, 7
        %v327 = vsub.s32 2, %v326
        %v328 = vrot.slane %v315, %v327
        %v331 = vlaneseq
        %v332 = vshrl.u32 %v331, 7
        %v333 = vsub.s32 0, %v332
        %v334 = vrot.slane %v324, %v333
        %v335 = vlaneseq
        %v336 = vshrl.u32 %v335, 7
        %v337 = vsub.s32 0, %v336
        %v338 = vrot.slane %v328, %v337
        %v341 = vcombine.low %v334, %v338
        %v343 = vmul.f32 %v304, %v341
        %v344 = vlaneseq
        %v345 = vshrl.u32 %v344, 7
        %v346 = vsub.s32 1, %v345
        %v347 = vrot.slane %v315, %v346
        %v348 = vlaneseq
        %v349 = vshrl.u32 %v348, 7
        %v350 = vsub.s32 3, %v349
        %v351 = vrot.slane %v315, %v350
        %v354 = vlaneseq
        %v355 = vshrl.u32 %v354, 7
        %v356 = vsub.s32 1, %v355
        %v357 = vrot.slane %v347, %v356
        %v358 = vlaneseq
        %v359 = vshrl.u32 %v358, 7
        %v360 = vsub.s32 1, %v359
        %v361 = vrot.slane %v351, %v360
        %v364 = vcombine.low %v357, %v361
        %v366 = vmul.f32 %v304, %v364
        %v368 = vcombine.high %v343, %v343
        %369 = vrot.lane.b32.xlu0 %v343, 17
        %v370 = vpop.permute.xlu0 %369
        %371 = vrot.lane.b32.xlu0 %v368, 17
        %v372 = vpop.permute.xlu0 %371
        %vm373 = vcmask 138240
        %v374 = vsel %vm373, %v370, %v372
        %v377 = vsel %vm373, 0.0, %v370
        %379 = vset.pattern.permute.xlu0 0
        %380 = vperm.xlu0 %379, %v305
        %v381 = vpop.permute.xlu0 %380
        %v383 = vmul.f32 %v377, %v381
        %v384 = vmul.f32 %v374, %v381
        %v385 = vadd.f32 %v383, 0.0
        %v386 = vadd.f32 %v384, 0.0
        %v388 = vcombine.high %v304, %v304
        %389 = vrot.lane.b32.xlu0 %v304, 16
        %v390 = vpop.permute.xlu0 %389
        %391 = vrot.lane.b32.xlu0 %v388, 16
        %v392 = vpop.permute.xlu0 %391
        %vm393 = vcmask 130048
        %v394 = vsel %vm393, %v390, %v392
        %v397 = vsel %vm393, 0.0, %v390
        %399 = vset.pattern.permute.xlu0 0
        %400 = vperm.xlu0 %399, %v306
        %v401 = vpop.permute.xlu0 %400
        %v403 = vmul.f32 %v397, %v401
        %v404 = vmul.f32 %v394, %v401
        %v405 = vadd.f32 %v385, %v403
        %v406 = vadd.f32 %v386, %v404
        %v408 = vcombine.high %v366, %v366
        %409 = vrot.lane.b32.xlu0 %v366, 15
        %v410 = vpop.permute.xlu0 %409
        %411 = vrot.lane.b32.xlu0 %v408, 15
        %v412 = vpop.permute.xlu0 %411
        %vm413 = vcmask 121856
        %v414 = vsel %vm413, %v410, %v412
        %v417 = vsel %vm413, 0.0, %v410
        %419 = vset.pattern.permute.xlu0 0
        %420 = vperm.xlu0 %419, %v307
        %v421 = vpop.permute.xlu0 %420
        %v423 = vmul.f32 %v417, %v421
        %v424 = vmul.f32 %v414, %v421
        %v425 = vadd.f32 %v405, %v423
        %v426 = vadd.f32 %v406, %v424
        %427 = vrot.lane.b32.xlu0 %v343, 1
        %v428 = vpop.permute.xlu0 %427
        %429 = vrot.lane.b32.xlu0 %v368, 1
        %v430 = vpop.permute.xlu0 %429
        %vm431 = vcmask 7168
        %v432 = vsel %vm431, %v428, %v430
        %v435 = vsel %vm431, 0.0, %v428
        %437 = vset.pattern.permute.xlu0 0
        %438 = vperm.xlu0 %437, %v308
        %v439 = vpop.permute.xlu0 %438
        %v441 = vmul.f32 %v435, %v439
        %v442 = vmul.f32 %v432, %v439
        %v443 = vadd.f32 %v425, %v441
        %v444 = vadd.f32 %v426, %v442
        %446 = vset.pattern.permute.xlu0 0
        %447 = vperm.xlu0 %446, %v309
        %v448 = vpop.permute.xlu0 %447
        %v450 = vunpack.c.l.s4 839922192
        %v451 = vunpack.c.0.s8 %v450
        %v452 = vlaneseq
        %v453 = vshrl.u32 %v452, 7
        %v454 = vsub.s32 %v451, %v453
        %v455 = vrot.slane %v448, %v454
        %v457 = vmul.f32 %v304, %v455
        %v459 = vcombine.high %v457, %v457
        %v461 = vadd.f32 %v443, %v457
        %v462 = vadd.f32 %v444, %v459
        %463 = vrot.lane.b32.xlu0 %v366, 127
        %v464 = vpop.permute.xlu0 %463
        %465 = vrot.lane.b32.xlu0 %v408, 127
        %v466 = vpop.permute.xlu0 %465
        %vm467 = vcmask 1039360
        %v468 = vsel %vm467, %v464, %v466
        %v471 = vsel %vm467, %v466, 0.0
        %473 = vset.pattern.permute.xlu0 0
        %474 = vperm.xlu0 %473, %v310
        %v475 = vpop.permute.xlu0 %474
        %v477 = vmul.f32 %v468, %v475
        %v478 = vmul.f32 %v471, %v475
        %v479 = vadd.f32 %v461, %v477
        %v480 = vadd.f32 %v462, %v478
        %481 = vrot.lane.b32.xlu0 %v343, 113
        %v482 = vpop.permute.xlu0 %481
        %483 = vrot.lane.b32.xlu0 %v368, 113
        %v484 = vpop.permute.xlu0 %483
        %vm485 = vcmask 924672
        %v486 = vsel %vm485, %v482, %v484
        %v489 = vsel %vm485, %v484, 0.0
        %491 = vset.pattern.permute.xlu0 0
        %492 = vperm.xlu0 %491, %v311
        %v493 = vpop.permute.xlu0 %492
        %v495 = vmul.f32 %v486, %v493
        %v496 = vmul.f32 %v489, %v493
        %v497 = vadd.f32 %v479, %v495
        %v498 = vadd.f32 %v480, %v496
        %499 = vrot.lane.b32.xlu0 %v304, 112
        %v500 = vpop.permute.xlu0 %499
        %501 = vrot.lane.b32.xlu0 %v388, 112
        %v502 = vpop.permute.xlu0 %501
        %vm503 = vcmask 916480
        %v504 = vsel %vm503, %v500, %v502
        %v507 = vsel %vm503, %v502, 0.0
        %509 = vset.pattern.permute.xlu0 0
        %510 = vperm.xlu0 %509, %v312
        %v511 = vpop.permute.xlu0 %510
        %v513 = vmul.f32 %v504, %v511
        %v514 = vmul.f32 %v507, %v511
        %v515 = vadd.f32 %v497, %v513
        %v516 = vadd.f32 %v498, %v514
        %517 = vrot.lane.b32.xlu0 %v366, 111
        %v518 = vpop.permute.xlu0 %517
        %519 = vrot.lane.b32.xlu0 %v408, 111
        %v520 = vpop.permute.xlu0 %519
        %vm521 = vcmask 908288
        %v522 = vsel %vm521, %v518, %v520
        %v525 = vsel %vm521, %v520, 0.0
        %527 = vset.pattern.permute.xlu0 0
        %528 = vperm.xlu0 %527, %v313
        %v529 = vpop.permute.xlu0 %528
        %v531 = vmul.f32 %v522, %v529
        %v532 = vmul.f32 %v525, %v529
        %v533 = vadd.f32 %v515, %v531
        %v534 = vadd.f32 %v516, %v532
        %v535 = vmul.f32 %v533, %v533
        %v536 = vmul.f32 %v534, %v534
        %vm537 = vcmask 1043456
        %v538 = vsel %vm537, %v533, 0.0
        %v539 = vsel %vm537, %v534, 0.0
        %v540 = vadd.f32 %v538, %v539
        %541 = vadd.xlane.f32.xlu0 %v540
        %v542 = vpop.xlane.xlu0 %541
        %v543 = vsel %vm537, %v535, 0.0
        %v544 = vsel %vm537, %v536, 0.0
        %v545 = vadd.f32 %v543, %v544
        %546 = vadd.xlane.f32.xlu0 %v545
        %v547 = vpop.xlane.xlu0 %546
        %v548 = vmul.f32 %v542, 0.00390625
        %v549 = vmul.f32 %v547, 0.00390625
        %v550 = vmul.f32 %v548, %v548
        %v551 = vsub.f32 %v549, %v550
        %v552 = vmax.f32 %v551, 0.0
        %v553 = vsub.f32 %v533, %v548
        %v554 = vsub.f32 %v534, %v548
        %v555 = vadd.f32 %v552, 1e-05
        %v556 = vrsqrt.pop %v555
        %v557 = vmul.f32 %v553, %v556
        %v558 = vmul.f32 %v554, %v556
        %560 = vset.pattern.permute.xlu0 0
        %561 = vperm.xlu0 %560, %v316
        %v562 = vpop.permute.xlu0 %561
        %v564 = vmul.f32 %v557, %v562
        %v565 = vmul.f32 %v558, %v562
        %567 = vset.pattern.permute.xlu0 0
        %568 = vperm.xlu0 %567, %v317
        %v569 = vpop.permute.xlu0 %568
        %v571 = vadd.f32 %v564, %v569
        %v572 = vadd.f32 %v565, %v569
        %v573 = vmax.f32 %v571, 0.0
        %v574 = vmax.f32 %v572, 0.0
        %576 = vset.pattern.permute.xlu0 0
        %577 = vperm.xlu0 %576, %v314
        %v578 = vpop.permute.xlu0 %577
        %v580 = vlaneseq
        %v581 = vshrl.u32 %v580, 7
        %v582 = vsub.s32 0, %v581
        %v583 = vrot.slane %v573, %v582
        %v584 = vlaneseq
        %v585 = vshrl.u32 %v584, 7
        %v586 = vsub.s32 0, %v585
        %v587 = vrot.slane %v574, %v586
        %v588 = vmul.f32 %v578, %v583
        %v589 = vmul.f32 %v578, %v587
        %v590 = vadd.f32 %v588, 0.0
        %v591 = vadd.f32 %v589, 0.0
        %592 = vset.pattern.permute.xlu0 1
        %593 = vperm.xlu0 %592, %v314
        %v594 = vpop.permute.xlu0 %593
        %v596 = vlaneseq
        %v597 = vshrl.u32 %v596, 7
        %v598 = vsub.s32 1, %v597
        %v599 = vrot.slane %v573, %v598
        %v600 = vlaneseq
        %v601 = vshrl.u32 %v600, 7
        %v602 = vsub.s32 1, %v601
        %v603 = vrot.slane %v574, %v602
        %v604 = vmul.f32 %v594, %v599
        %v605 = vmul.f32 %v594, %v603
        %v606 = vadd.f32 %v590, %v604
        %v607 = vadd.f32 %v591, %v605
        %608 = vset.pattern.permute.xlu0 2
        %609 = vperm.xlu0 %608, %v314
        %v610 = vpop.permute.xlu0 %609
        %v612 = vlaneseq
        %v613 = vshrl.u32 %v612, 7
        %v614 = vsub.s32 2, %v613
        %v615 = vrot.slane %v573, %v614
        %v616 = vlaneseq
        %v617 = vshrl.u32 %v616, 7
        %v618 = vsub.s32 2, %v617
        %v619 = vrot.slane %v574, %v618
        %v620 = vmul.f32 %v610, %v615
        %v621 = vmul.f32 %v610, %v619
        %v622 = vadd.f32 %v606, %v620
        %v623 = vadd.f32 %v607, %v621
        %624 = vset.pattern.permute.xlu0 3
        %625 = vperm.xlu0 %624, %v314
        %v626 = vpop.permute.xlu0 %625
        %v628 = vlaneseq
        %v629 = vshrl.u32 %v628, 7
        %v630 = vsub.s32 3, %v629
        %v631 = vrot.slane %v573, %v630
        %v632 = vlaneseq
        %v633 = vshrl.u32 %v632, 7
        %v634 = vsub.s32 3, %v633
        %v635 = vrot.slane %v574, %v634
        %v636 = vmul.f32 %v626, %v631
        %v637 = vmul.f32 %v626, %v635
        %v638 = vadd.f32 %v622, %v636
        %v639 = vadd.f32 %v623, %v637
        %v640 = vmul.f32 %v638, %v638
        %v641 = vmul.f32 %v639, %v639
        %v642 = vadd.f32 %v638, %v639
        %643 = vadd.xlane.f32.xlu0 %v642
        %v644 = vpop.xlane.xlu0 %643
        %v645 = vadd.f32 %v640, %v641
        %646 = vadd.xlane.f32.xlu0 %v645
        %v647 = vpop.xlane.xlu0 %646
        %v648 = vmul.f32 %v644, 0.00390625
        %v649 = vmul.f32 %v647, 0.00390625
        %v650 = vmul.f32 %v648, %v648
        %v651 = vsub.f32 %v649, %v650
        %v652 = vmax.f32 %v651, 0.0
        %v653 = vsub.f32 %v638, %v648
        %v654 = vsub.f32 %v639, %v648
        %v655 = vadd.f32 %v652, 1e-05
        %v656 = vrsqrt.pop %v655
        %v657 = vmul.f32 %v653, %v656
        %v658 = vmul.f32 %v654, %v656
        %660 = vset.pattern.permute.xlu0 0
        %661 = vperm.xlu0 %660, %v318
        %v662 = vpop.permute.xlu0 %661
        %v664 = vmul.f32 %v657, %v662
        %v665 = vmul.f32 %v658, %v662
        %667 = vset.pattern.permute.xlu0 0
        %668 = vperm.xlu0 %667, %v319
        %v669 = vpop.permute.xlu0 %668
        %v671 = vadd.f32 %v664, %v669
        %v672 = vadd.f32 %v665, %v669
        %v673 = vmax.f32 %v671, 0.0
        %v674 = vmax.f32 %v672, 0.0
        %675 = vst [vmem:[%s298] sm:$0xff] %v673
        %676 = vst [vmem:[%s298 + $0x8] sm:$0xff] %v674
        %s677 = sand.u32 %s203, 1
        %s678 = scalar_lea.sflag [#allocation3], %s677
        %s679 = sand.u32 %s203, 1
        %s680 = smul.addr %s679, 16
        %s681 = scalar_lea.vmem [#allocation2], %s680
        // Predicated region
        $region53: #{tpu_custom_call.1} parent=51 // pred_check
          %p682 = pneg %p213
        $region54: #{tpu_custom_call.1} parent=51 // pred_check_branch
          %684 = sbr.rel (%p682) target = $region56
        $region55: #{tpu_custom_call.1} parent=51 // pred_region
          %s686 = ssub.s32 256, 256
          %687 = vsyncadd %s678, %s686
          %s688 = smul.addr %s22, 2
          %s689 = smul.addr %s688, 128
          %s690 = scalar_lea.hbm %s8, %s689
          %s692 = sshll.u32 %s681, 4
          %s693 = int_to_ptr.vmem [resolvable:$true] %s692
          %695 = dma.vmem_to_hbm [thread:$0]  %s693, 256, %s690, %s678
        $region56: #{tpu_custom_call.1} parent=51 // pred_fallthru
          _
      $region52: #{tpu_custom_call.1} parent=5 // pred_fallthru
        _
      %p696 = scmp.le.s32.totalorder 2, %s17
      // Predicated region
      $region57: #{tpu_custom_call.1} parent=5 // pred_check
        %p697 = pneg %p696
      $region58: #{tpu_custom_call.1} parent=5 // pred_check_branch
        %699 = sbr.rel (%p697) target = $region60
      $region59: #{tpu_custom_call.1} parent=5 // pred_region
        %s700 = ssub.s32 %s17, 2
        // Predicated region
        $region61: #{tpu_custom_call.1} parent=59 // pred_check
          %p701 = pneg %p219
        $region62: #{tpu_custom_call.1} parent=59 // pred_check_branch
          %703 = sbr.rel (%p701) target = $region64
        $region63: #{tpu_custom_call.1} parent=59 // pred_region
          %s704 = sand.u32 %s204, 1
          %s705 = scalar_lea.sflag [#allocation3], %s704
          %s706 = sand.u32 %s204, 1
          %s707 = smul.addr %s706, 16
          %s708 = scalar_lea.vmem [#allocation2], %s707
          %709 = dma.done %s705, 256
        $region64: #{tpu_custom_call.1} parent=59 // pred_fallthru
          _
      $region60: #{tpu_custom_call.1} parent=5 // pred_fallthru
        _
    $region6: #{tpu_custom_call.1} parent=1 // loop_footer
      %s21 = sadd.s32 1, %s17
    $region7: #{tpu_custom_call.1} parent=1 // loop_footer_branch
      %16 = sbr.rel target = $region3
    $region8: #{tpu_custom_call.1} parent=1 // loop_exit
      _
    %710 = vsyncpa [#allocation3], 1
    %s711 = scalar_lea.sflag [#allocation3], 1
    %712 = vsyncpa %s711, 1

</llo_original>
